<compile_context>
chip_gen: v7x
topology: tpu7x:2x2x1
jax: 0.10.0
libtpu: 0.0.40
codegen_flags: <defaults>
</compile_context>

<pallas_src>
import functools

import jax
import jax.numpy as jnp
from jax.experimental import pallas as pl
from jax.experimental.pallas import tpu as pltpu


def _round_up(x, m):
    return (x + m - 1) // m * m


def rnn_seq_kernel(x_ref, h0_ref, wcat_ref, bcat_ref, wo_ref, bo_ref,
                   out_ref, hfin_ref, xh_scr, *, i_pad):
    """One grid step == one RNN timestep.

    The recurrent hidden state lives in the second half of the VMEM scratch
    `xh_scr`, which doubles as the fused [x_t | h] matmul operand.
    """
    t = pl.program_id(0)

    # Load the initial hidden state into the recurrent slot exactly once.
    @pl.when(t == 0)
    def _():
        xh_scr[:, i_pad:] = h0_ref[...]

    # Stream this timestep's input into the first half of the fused operand.
    xh_scr[:, :i_pad] = x_ref[0]

    # Fused i2h + h2h: a single MXU matmul on the concatenated operand,
    # with the two biases pre-summed into bcat.
    pre = jnp.dot(xh_scr[...], wcat_ref[...],
                  preferred_element_type=jnp.float32) + bcat_ref[...]
    h_new = jnp.tanh(pre)

    # Carry the hidden state to the next step (VMEM only, no HBM traffic).
    xh_scr[:, i_pad:] = h_new
    # Constant output block index -> VMEM-resident, written back to HBM once.
    hfin_ref[...] = h_new

    # h2o + numerically stable log_softmax.  Padded output lanes carry a
    # -1e30 bias (baked into bo) so they vanish from the softmax for free.
    logits = jnp.dot(h_new, wo_ref[...],
                     preferred_element_type=jnp.float32) + bo_ref[...]
    m = jnp.max(logits, axis=1, keepdims=True)
    z = logits - m
    lse = jnp.log(jnp.sum(jnp.exp(z), axis=1, keepdims=True))
    out_ref[0] = (z - lse).astype(out_ref.dtype)


def prepare_params(params, input_size, hidden_size, output_size):
    """One-time glue (outside the hot path): transpose PyTorch (out,in)
    weights, stack [W_i2h; W_h2h], pre-sum biases, pad to aligned shapes."""
    wi, bi, wh, bh, wo, bo = params
    i_pad = _round_up(input_size, 128)
    h_pad = _round_up(hidden_size, 128)
    o_pad = _round_up(output_size, 128)

    w_cat = jnp.zeros((i_pad + h_pad, h_pad), jnp.float32)
    w_cat = w_cat.at[:input_size, :hidden_size].set(wi.T)
    w_cat = w_cat.at[i_pad:i_pad + hidden_size, :hidden_size].set(wh.T)

    b_cat = jnp.zeros((1, h_pad), jnp.float32)
    b_cat = b_cat.at[0, :hidden_size].set(bi + bh)

    wo_p = jnp.zeros((h_pad, o_pad), jnp.float32)
    wo_p = wo_p.at[:hidden_size, :output_size].set(wo.T)

    # -1e30 in padded output lanes kills them in log_softmax without a mask.
    bo_p = jnp.full((1, o_pad), -1e30, jnp.float32)
    bo_p = bo_p.at[0, :output_size].set(bo)

    return (w_cat, b_cat, wo_p, bo_p), (i_pad, h_pad, o_pad)


def rnn_forward_seq(x_seq, h0, prepared, pads, dims):
    """Run the full T-step recurrence inside one fused Pallas kernel.

    x_seq: (T, B, input_size), h0: (B, hidden_size)
    Returns per-step log-probs (T, B, output_size) and final hidden (B, hidden_size).
    """
    input_size, hidden_size, output_size = dims
    i_pad, h_pad, o_pad = pads
    w_cat, b_cat, wo_p, bo_p = prepared

    T, B, _ = x_seq.shape
    b_pad = _round_up(max(B, 8), 8)

    x_p = jnp.zeros((T, b_pad, i_pad), jnp.float32)
    x_p = x_p.at[:, :B, :input_size].set(x_seq.astype(jnp.float32))
    h0_p = jnp.zeros((b_pad, h_pad), jnp.float32)
    h0_p = h0_p.at[:B, :hidden_size].set(h0.astype(jnp.float32))

    kernel = functools.partial(rnn_seq_kernel, i_pad=i_pad)

    out_p, hfin_p = pl.pallas_call(
        kernel,
        grid=(T,),
        in_specs=[
            pl.BlockSpec((1, b_pad, i_pad), lambda t: (t, 0, 0)),    # x_t streamed
            pl.BlockSpec((b_pad, h_pad), lambda t: (0, 0)),          # h0 (read at t=0)
            pl.BlockSpec((i_pad + h_pad, h_pad), lambda t: (0, 0)),  # [Wi;Wh] resident
            pl.BlockSpec((1, h_pad), lambda t: (0, 0)),              # bi+bh resident
            pl.BlockSpec((h_pad, o_pad), lambda t: (0, 0)),          # W_h2o resident
            pl.BlockSpec((1, o_pad), lambda t: (0, 0)),              # b_h2o resident
        ],
        out_specs=(
            pl.BlockSpec((1, b_pad, o_pad), lambda t: (t, 0, 0)),    # out_t streamed
            pl.BlockSpec((b_pad, h_pad), lambda t: (0, 0)),          # final hidden
        ),
        out_shape=(
            jax.ShapeDtypeStruct((T, b_pad, o_pad), jnp.float32),
            jax.ShapeDtypeStruct((b_pad, h_pad), jnp.float32),
        ),
        scratch_shapes=[pltpu.VMEM((b_pad, i_pad + h_pad), jnp.float32)],
        compiler_params=pltpu.CompilerParams(
            dimension_semantics=("arbitrary",)),   # time is a serial recurrence
    )(x_p, h0_p, w_cat, b_cat, wo_p, bo_p)

    return out_p[:, :B, :output_size], hfin_p[:B, :hidden_size]


def rnn_step(x, h, prepared, pads, dims):
    """Module-equivalent single step: forward(input, hidden) -> (output, hidden)."""
    out, h_new = rnn_forward_seq(x[None], h, prepared, pads, dims)
    return out[0], h_new


def init_params(key, input_size, hidden_size, output_size):
    """Deterministic PyTorch-style Linear init: U(-1/sqrt(fan_in), +1/sqrt(fan_in))."""
    ks = jax.random.split(key, 6)

    def linear(kw, kb, fan_in, fan_out):
        bound = 1.0 / (fan_in ** 0.5)
        w = jax.random.uniform(kw, (fan_out, fan_in), jnp.float32, -bound, bound)
        b = jax.random.uniform(kb, (fan_out,), jnp.float32, -bound, bound)
        return w, b

    wi, bi = linear(ks[0], ks[1], input_size, hidden_size)   # i2h
    wh, bh = linear(ks[2], ks[3], hidden_size, hidden_size)  # h2h
    wo, bo = linear(ks[4], ks[5], hidden_size, output_size)  # h2o
    return wi, bi, wh, bh, wo, bo


def reference_forward_seq(x_seq, h0, params):
    """Pure-JAX reference: the PyTorch module's forward applied per step."""
    wi, bi, wh, bh, wo, bo = params
    hp = jax.lax.Precision.HIGHEST

    def step(h, x):
        h_new = jnp.tanh(jnp.dot(x, wi.T, precision=hp) + bi
                         + jnp.dot(h, wh.T, precision=hp) + bh)
        logits = jnp.dot(h_new, wo.T, precision=hp) + bo
        return h_new, jax.nn.log_softmax(logits, axis=1)

    h_fin, outs = jax.lax.scan(step, h0, x_seq)
    return outs, h_fin


if __name__ == "__main__":
    key = jax.random.PRNGKey(0)
    k_param, k_x, k_h = jax.random.split(key, 3)

    batch = 2
    seq_len = 8
    input_size = 16
    hidden_size = 32
    output_size = 8
    dims = (input_size, hidden_size, output_size)

    params = init_params(k_param, input_size, hidden_size, output_size)
    prepared, pads = prepare_params(params, input_size, hidden_size, output_size)

    x_seq = jax.random.normal(k_x, (seq_len, batch, input_size), jnp.float32)
    # Module's initHidden() returns zeros; use nonzero hidden to exercise h2h.
    h0 = jax.random.normal(k_h, (batch, hidden_size), jnp.float32)

    out, h_fin = rnn_forward_seq(x_seq, h0, prepared, pads, dims)
    out = jax.block_until_ready(out)
    h_fin = jax.block_until_ready(h_fin)

    out_ref, h_ref = reference_forward_seq(x_seq, h0, params)
    assert out.shape == (seq_len, batch, output_size)
    assert h_fin.shape == (batch, hidden_size)
    assert jnp.allclose(out, out_ref, atol=1e-4, rtol=1e-4), "output mismatch"
    assert jnp.allclose(h_fin, h_ref, atol=1e-4, rtol=1e-4), "hidden mismatch"

    # Single-step call == the PyTorch module's forward(input, hidden).
    out1, h1 = rnn_step(x_seq[0], h0, prepared, pads, dims)
    out1 = jax.block_until_ready(out1)
    assert jnp.allclose(out1, out_ref[0], atol=1e-4, rtol=1e-4), "step mismatch"

    print("KERNEL_OK")
</pallas_src>

<mosaic_0001>
module attributes {stable_mosaic.version = 11 : i64} {
  func.func @rnn_seq_kernel(%arg0: i32, %arg1: memref<1x8x128xf32, #tpu.memory_space<vmem>>, %arg2: memref<8x128xf32, #tpu.memory_space<vmem>>, %arg3: memref<256x128xf32, #tpu.memory_space<vmem>>, %arg4: memref<1x128xf32, #tpu.memory_space<vmem>>, %arg5: memref<128x128xf32, #tpu.memory_space<vmem>>, %arg6: memref<1x128xf32, #tpu.memory_space<vmem>>, %arg7: memref<1x8x128xf32, #tpu.memory_space<vmem>>, %arg8: memref<8x128xf32, #tpu.memory_space<vmem>>, %arg9: memref<8x256xf32, #tpu.memory_space<vmem>>) attributes {dimension_semantics = [#tpu.dimension_semantics<arbitrary>], iteration_bounds = array<i64: 8>, scalar_prefetch = 0 : i64, scratch_operands = 1 : i64, tpu.core_type = #tpu.core_type<tc>, window_params = [{transform_indices = @transform_0, window_bounds = array<i64: 1, 8, 128>}, {pipeline_mode = #tpu.pipeline_mode<synchronous>, transform_indices = @transform_1, window_bounds = array<i64: 8, 128>}, {pipeline_mode = #tpu.pipeline_mode<synchronous>, transform_indices = @transform_2, window_bounds = array<i64: 256, 128>}, {pipeline_mode = #tpu.pipeline_mode<synchronous>, transform_indices = @transform_3, window_bounds = array<i64: 1, 128>}, {pipeline_mode = #tpu.pipeline_mode<synchronous>, transform_indices = @transform_4, window_bounds = array<i64: 128, 128>}, {pipeline_mode = #tpu.pipeline_mode<synchronous>, transform_indices = @transform_5, window_bounds = array<i64: 1, 128>}, {transform_indices = @transform_6, window_bounds = array<i64: 1, 8, 128>}, {pipeline_mode = #tpu.pipeline_mode<synchronous>, transform_indices = @transform_7, window_bounds = array<i64: 8, 128>}]} {
    %c0_i32 = arith.constant 0 : i32
    %0 = arith.cmpi eq, %arg0, %c0_i32 : i32
    %1 = arith.extui %0 : i1 to i32
    %c0_i32_0 = arith.constant 0 : i32
    %2 = arith.cmpi ne, %1, %c0_i32_0 : i32
    scf.if %2 {
      %c0_24 = arith.constant 0 : index
      %c0_25 = arith.constant 0 : index
      %33 = vector.load %arg2[%c0_24, %c0_25] : memref<8x128xf32, #tpu.memory_space<vmem>>, vector<8x128xf32>
      %c0_26 = arith.constant 0 : index
      %c128_27 = arith.constant 128 : index
      %34 = vector.load %arg9[%c0_26, %c128_27] : memref<8x256xf32, #tpu.memory_space<vmem>>, vector<8x128xf32>
      tpu.vector_store %arg9[%c0_26, %c128_27], %33 {strides = array<i32>} : memref<8x256xf32, #tpu.memory_space<vmem>>, vector<8x128xf32>,
    } else {
    }
    %c0 = arith.constant 0 : index
    %c0_1 = arith.constant 0 : index
    %c0_2 = arith.constant 0 : index
    %3 = vector.load %arg1[%c0, %c0_1, %c0_2] : memref<1x8x128xf32, #tpu.memory_space<vmem>>, vector<1x8x128xf32>
    %4 = vector.shape_cast %3 : vector<1x8x128xf32> to vector<8x128xf32>
    %c0_3 = arith.constant 0 : index
    %c0_4 = arith.constant 0 : index
    %5 = vector.load %arg9[%c0_3, %c0_4] : memref<8x256xf32, #tpu.memory_space<vmem>>, vector<8x128xf32>
    tpu.vector_store %arg9[%c0_3, %c0_4], %4 {strides = array<i32>} : memref<8x256xf32, #tpu.memory_space<vmem>>, vector<8x128xf32>,
    %c0_5 = arith.constant 0 : index
    %c0_6 = arith.constant 0 : index
    %6 = vector.load %arg9[%c0_5, %c0_6] : memref<8x256xf32, #tpu.memory_space<vmem>>, vector<8x256xf32>
    %c0_7 = arith.constant 0 : index
    %c0_8 = arith.constant 0 : index
    %7 = vector.load %arg3[%c0_7, %c0_8] : memref<256x128xf32, #tpu.memory_space<vmem>>, vector<256x128xf32>
    %cst = arith.constant dense<0.000000e+00> : vector<8x128xf32>
    %8 = tpu.matmul %6, %7, %cst {dimension_numbers = #tpu.dot_dimension_numbers<[1], [0], [0], [1], [0, 0, 1, 1], [], []>} : vector<8x256xf32>, vector<256x128xf32>, vector<8x128xf32> -> vector<8x128xf32>
    %c0_9 = arith.constant 0 : index
    %c0_10 = arith.constant 0 : index
    %9 = vector.load %arg4[%c0_9, %c0_10] : memref<1x128xf32, #tpu.memory_space<vmem>>, vector<1x128xf32>
    %10 = vector.broadcast %9 : vector<1x128xf32> to vector<8x128xf32>
    %11 = arith.addf %8, %10 : vector<8x128xf32>
    %12 = math.tanh %11 : vector<8x128xf32>
    %c0_11 = arith.constant 0 : index
    %c128 = arith.constant 128 : index
    %13 = vector.load %arg9[%c0_11, %c128] : memref<8x256xf32, #tpu.memory_space<vmem>>, vector<8x128xf32>
    tpu.vector_store %arg9[%c0_11, %c128], %12 {strides = array<i32>} : memref<8x256xf32, #tpu.memory_space<vmem>>, vector<8x128xf32>,
    %c0_12 = arith.constant 0 : index
    %c0_13 = arith.constant 0 : index
    %14 = vector.load %arg8[%c0_12, %c0_13] : memref<8x128xf32, #tpu.memory_space<vmem>>, vector<8x128xf32>
    tpu.vector_store %arg8[%c0_12, %c0_13], %12 {strides = array<i32>} : memref<8x128xf32, #tpu.memory_space<vmem>>, vector<8x128xf32>,
    %c0_14 = arith.constant 0 : index
    %c0_15 = arith.constant 0 : index
    %15 = vector.load %arg5[%c0_14, %c0_15] : memref<128x128xf32, #tpu.memory_space<vmem>>, vector<128x128xf32>
    %cst_16 = arith.constant dense<0.000000e+00> : vector<8x128xf32>
    %16 = tpu.matmul %12, %15, %cst_16 {dimension_numbers = #tpu.dot_dimension_numbers<[1], [0], [0], [1], [0, 0, 1, 1], [], []>} : vector<8x128xf32>, vector<128x128xf32>, vector<8x128xf32> -> vector<8x128xf32>
    %c0_17 = arith.constant 0 : index
    %c0_18 = arith.constant 0 : index
    %17 = vector.load %arg6[%c0_17, %c0_18] : memref<1x128xf32, #tpu.memory_space<vmem>>, vector<1x128xf32>
    %18 = vector.broadcast %17 : vector<1x128xf32> to vector<8x128xf32>
    %19 = arith.addf %16, %18 : vector<8x128xf32>
    %cst_19 = arith.constant dense<0xFF800000> : vector<8xf32>
    %20 = vector.multi_reduction <maximumf>, %19, %cst_19 [1] : vector<8x128xf32> to vector<8xf32>
    %21 = vector.shape_cast %20 : vector<8xf32> to vector<8x1xf32>
    %22 = vector.broadcast %21 : vector<8x1xf32> to vector<8x128xf32>
    %23 = arith.subf %19, %22 : vector<8x128xf32>
    %24 = math.exp %23 : vector<8x128xf32>
    %cst_20 = arith.constant dense<0.000000e+00> : vector<8xf32>
    %25 = vector.multi_reduction <add>, %24, %cst_20 [1] : vector<8x128xf32> to vector<8xf32>
    %26 = vector.shape_cast %25 : vector<8xf32> to vector<8x1xf32>
    %27 = math.log %26 : vector<8x1xf32>
    %28 = vector.broadcast %27 : vector<8x1xf32> to vector<8x128xf32>
    %29 = arith.subf %23, %28 : vector<8x128xf32>
    %c0_21 = arith.constant 0 : index
    %c0_22 = arith.constant 0 : index
    %c0_23 = arith.constant 0 : index
    %30 = vector.load %arg7[%c0_21, %c0_22, %c0_23] : memref<1x8x128xf32, #tpu.memory_space<vmem>>, vector<1x8x128xf32>
    %31 = vector.shape_cast %30 : vector<1x8x128xf32> to vector<8x128xf32>
    %32 = vector.shape_cast %29 : vector<8x128xf32> to vector<1x8x128xf32>
    tpu.vector_store %arg7[%c0_21, %c0_22, %c0_23], %32 {strides = array<i32>} : memref<1x8x128xf32, #tpu.memory_space<vmem>>, vector<1x8x128xf32>,
    return
  }
  func.func @transform_0(%arg0: i32) -> (i32, i32, i32) {
    %c0_i32 = arith.constant 0 : i32
    %c0_i32_0 = arith.constant 0 : i32
    %c0_i32_1 = arith.constant 0 : i32
    return %arg0, %c0_i32, %c0_i32_0 : i32, i32, i32
  }
  func.func @transform_1(%arg0: i32) -> (i32, i32) {
    %c0_i32 = arith.constant 0 : i32
    %c0_i32_0 = arith.constant 0 : i32
    %c0_i32_1 = arith.constant 0 : i32
    return %c0_i32, %c0_i32_0 : i32, i32
  }
  func.func @transform_2(%arg0: i32) -> (i32, i32) {
    %c0_i32 = arith.constant 0 : i32
    %c0_i32_0 = arith.constant 0 : i32
    %c0_i32_1 = arith.constant 0 : i32
    return %c0_i32, %c0_i32_0 : i32, i32
  }
  func.func @transform_3(%arg0: i32) -> (i32, i32) {
    %c0_i32 = arith.constant 0 : i32
    %c0_i32_0 = arith.constant 0 : i32
    %c0_i32_1 = arith.constant 0 : i32
    return %c0_i32, %c0_i32_0 : i32, i32
  }
  func.func @transform_4(%arg0: i32) -> (i32, i32) {
    %c0_i32 = arith.constant 0 : i32
    %c0_i32_0 = arith.constant 0 : i32
    %c0_i32_1 = arith.constant 0 : i32
    return %c0_i32, %c0_i32_0 : i32, i32
  }
  func.func @transform_5(%arg0: i32) -> (i32, i32) {
    %c0_i32 = arith.constant 0 : i32
    %c0_i32_0 = arith.constant 0 : i32
    %c0_i32_1 = arith.constant 0 : i32
    return %c0_i32, %c0_i32_0 : i32, i32
  }
  func.func @transform_6(%arg0: i32) -> (i32, i32, i32) {
    %c0_i32 = arith.constant 0 : i32
    %c0_i32_0 = arith.constant 0 : i32
    %c0_i32_1 = arith.constant 0 : i32
    return %arg0, %c0_i32, %c0_i32_0 : i32, i32, i32
  }
  func.func @transform_7(%arg0: i32) -> (i32, i32) {
    %c0_i32 = arith.constant 0 : i32
    %c0_i32_0 = arith.constant 0 : i32
    %c0_i32_1 = arith.constant 0 : i32
    return %c0_i32, %c0_i32_0 : i32, i32
  }
}

</mosaic_0001>

<llo_original>
// kernel: tpu_custom_call.1
$region0: #{tpu_custom_call.1}
  #allocation0 [shape = 'u32[]', space=smem, size = 0x4, offset = 0x4, fixed_abs, tag = 'smem constant byte address 0x4 - core index']
  #allocation1 [shape = 'u32[144,128]{1,0:T(1,128)}', space=vmem, size = 0x12000, scoped, tag = 'internal scratch']
  #allocation2 [shape = 'f32[8,256]{1,0:T(8,128)}', space=vmem, size = 0x2000, scoped, tag = 'scratch operand']
  %s0 = inlined_call_operand.hbm [shape: f32[8,8,128], index: 0, kind: input, shape index: {}]
  %s1 = inlined_call_operand.hbm [shape: f32[8,128], index: 1, kind: input, shape index: {}]
  %s2 = inlined_call_operand.hbm [shape: f32[256,128], index: 2, kind: input, shape index: {}]
  %s3 = inlined_call_operand.vmem [shape: f32[1,128], index: 3, kind: input, shape index: {}]
  %s4 = inlined_call_operand.hbm [shape: f32[128,128], index: 4, kind: input, shape index: {}]
  %s5 = inlined_call_operand.vmem [shape: f32[1,128], index: 5, kind: input, shape index: {}]
  %s6 = inlined_call_operand.hbm [shape: f32[8,8,128], index: 6, kind: output, shape index: {0}]
  %s7 = inlined_call_operand.hbm [shape: f32[8,128], index: 7, kind: output, shape index: {1}]
  %8 = xla_tuple %s6, %s7
  %s9 = sld [smem:[#allocation0]]
  $region85: #{tpu_custom_call.1} parent=0
    _
  %s11 = ssub.s32 1, %s9
  %s12 = scalar_select 0, %s11, %s9
  $region1: #{tpu_custom_call.1} parent=0
    #allocation3 [shape = 'u8[8192]{0}', space=vmem, size = 0x2000, scoped, tag = 'input window, operand 0']
    #allocation4 [shape = 's32[2]{0}', space=sflag, size = 0x8, scoped, tag = 'scoped memory for tpu_custom_call.1']
    #allocation5 [shape = 's32[2]{0}', space=sflag, size = 0x8, scoped, tag = 'scoped memory for tpu_custom_call.1']
    #allocation6 [shape = 'u8[4096]{0}', space=vmem, size = 0x1000, scoped, tag = 'input window, operand 1, single buffered']
    #allocation7 [shape = 's32[1]{0}', space=sflag, size = 0x4, scoped, tag = 'scoped memory for tpu_custom_call.1']
    #allocation8 [shape = 'u8[131072]{0}', space=vmem, size = 0x20000, scoped, tag = 'input window, operand 2, single buffered']
    #allocation9 [shape = 'u8[65536]{0}', space=vmem, size = 0x10000, scoped, tag = 'input window, operand 4, single buffered']
    #allocation10 [shape = 's32[1]{0}', space=sflag, size = 0x4, scoped, tag = 'scoped memory for tpu_custom_call.1']
    #allocation11 [shape = 'u8[8192]{0}', space=vmem, size = 0x2000, scoped, tag = 'output window, operand 0']
    #allocation12 [shape = 'u8[4096]{0}', space=vmem, size = 0x1000, scoped, tag = 'output window, operand 1, single buffered']
    #allocation13 [shape = 's32[1]{0}', space=sflag, size = 0x4, scoped, tag = 'scoped memory for tpu_custom_call.1']
    %13 = vsyncpa [#allocation4], 0
    %s14 = scalar_lea.sflag [#allocation4], 1
    %15 = vsyncpa %s14, 0
    %16 = vsyncpa [#allocation7], 0
    %17 = vsyncpa [#allocation10], 0
    %18 = vsyncpa [#allocation5], 0
    %s19 = scalar_lea.sflag [#allocation5], 1
    %20 = vsyncpa %s19, 0
    %21 = vsyncpa [#allocation13], 0
    loop: start=0, step=1, limit=10
    $region2: #{tpu_custom_call.1} parent=1 // loop_pre_header
      _
    $region3: #{tpu_custom_call.1} parent=1 // loop_header
      %s23 = sphi 0, %s27
      %p24 = scmp.ge.s32.totalorder %s23, 10
      %s33 = sphi 0, %s35
      %s36 = sphi 0, %s33
      %s37 = sphi 0, %s36
      %s53 = sphi 0, %s37
      %s57 = sphi 0, %s57
      %s59 = sphi 0, %s57
      %s60 = sphi 0, %s59
      %s74 = sphi 0, %s60
      %s78 = sphi 0, %s78
      %s80 = sphi 0, %s78
      %s81 = sphi 0, %s80
      %s95 = sphi 0, %s81
      %s99 = sphi 0, %s99
      %s101 = sphi 0, %s99
      %s102 = sphi 0, %s101
      %s116 = sphi 0, %s102
      %s120 = sphi 0, %s120
      %s122 = sphi 0, %s120
      %s123 = sphi 0, %s122
      %s137 = sphi 0, %s123
      %s141 = sphi 0, %s141
      %s143 = sphi 0, %s141
      %s144 = sphi 0, %s143
      %s158 = sphi 0, %s144
      %s164 = sphi 0, %s166
      %s167 = sphi 0, %s164
      %s168 = sphi 0, %s167
      %s184 = sphi 0, %s168
      %s188 = sphi 0, %s188
      %s190 = sphi 0, %s188
      %s191 = sphi 0, %s190
      %s205 = sphi 0, %s191
    $region4: #{tpu_custom_call.1} parent=1 // loop_header_branch
      %26 = sbr.rel (%p24) target = $region8
    $region5: #{tpu_custom_call.1} parent=1 // loop_body
      %s28 = ssub.s32 %s23, 1
      %s29 = ssub.s32 %s23, 2
      %s30 = sadd.s32 %s23, 1
      %s31 = ssub.s32 %s23, %s30
      %p32 = scmp.eq.s32.totalorder %s31, 0
      %s34 = sadd.s32 %s33, 1
      %s35 = scalar_select %p32, %s33, %s34
      %p38 = pneg %p32
      %p39 = scmp.eq.s32.totalorder %s23, 7
      %p40 = por %p38, %p39
      %p41 = scmp.ne.s32.totalorder %s33, %s36
      %p42 = scmp.eq.s32.totalorder %s23, 0
      %p43 = por %p41, %p42
      %p44 = scmp.ne.s32.totalorder %s33, %s36
      %p45 = scmp.eq.s32.totalorder %s28, 7
      %p46 = por %p44, %p45
      %p47 = scmp.ne.s32.totalorder %s36, %s37
      %p48 = scmp.eq.s32.totalorder %s28, 0
      %p49 = por %p47, %p48
      %p50 = scmp.ne.s32.totalorder %s36, %s37
      %p51 = scmp.eq.s32.totalorder %s29, 7
      %p52 = por %p50, %p51
      %p54 = scmp.ne.s32.totalorder %s37, %s53
      %p55 = scmp.eq.s32.totalorder %s29, 0
      %p56 = por %p54, %p55
      %s58 = sadd.s32 %s57, 1
      %p61 = scmp.eq.s32.totalorder %s23, 7
      %p62 = scmp.ne.s32.totalorder %s57, %s59
      %p63 = scmp.eq.s32.totalorder %s23, 0
      %p64 = por %p62, %p63
      %p65 = scmp.ne.s32.totalorder %s57, %s59
      %p66 = scmp.eq.s32.totalorder %s28, 7
      %p67 = por %p65, %p66
      %p68 = scmp.ne.s32.totalorder %s59, %s60
      %p69 = scmp.eq.s32.totalorder %s28, 0
      %p70 = por %p68, %p69
      %p71 = scmp.ne.s32.totalorder %s59, %s60
      %p72 = scmp.eq.s32.totalorder %s29, 7
      %p73 = por %p71, %p72
      %p75 = scmp.ne.s32.totalorder %s60, %s74
      %p76 = scmp.eq.s32.totalorder %s29, 0
      %p77 = por %p75, %p76
      %s79 = sadd.s32 %s78, 1
      %p82 = scmp.eq.s32.totalorder %s23, 7
      %p83 = scmp.ne.s32.totalorder %s78, %s80
      %p84 = scmp.eq.s32.totalorder %s23, 0
      %p85 = por %p83, %p84
      %p86 = scmp.ne.s32.totalorder %s78, %s80
      %p87 = scmp.eq.s32.totalorder %s28, 7
      %p88 = por %p86, %p87
      %p89 = scmp.ne.s32.totalorder %s80, %s81
      %p90 = scmp.eq.s32.totalorder %s28, 0
      %p91 = por %p89, %p90
      %p92 = scmp.ne.s32.totalorder %s80, %s81
      %p93 = scmp.eq.s32.totalorder %s29, 7
      %p94 = por %p92, %p93
      %p96 = scmp.ne.s32.totalorder %s81, %s95
      %p97 = scmp.eq.s32.totalorder %s29, 0
      %p98 = por %p96, %p97
      %s100 = sadd.s32 %s99, 1
      %p103 = scmp.eq.s32.totalorder %s23, 7
      %p104 = scmp.ne.s32.totalorder %s99, %s101
      %p105 = scmp.eq.s32.totalorder %s23, 0
      %p106 = por %p104, %p105
      %p107 = scmp.ne.s32.totalorder %s99, %s101
      %p108 = scmp.eq.s32.totalorder %s28, 7
      %p109 = por %p107, %p108
      %p110 = scmp.ne.s32.totalorder %s101, %s102
      %p111 = scmp.eq.s32.totalorder %s28, 0
      %p112 = por %p110, %p111
      %p113 = scmp.ne.s32.totalorder %s101, %s102
      %p114 = scmp.eq.s32.totalorder %s29, 7
      %p115 = por %p113, %p114
      %p117 = scmp.ne.s32.totalorder %s102, %s116
      %p118 = scmp.eq.s32.totalorder %s29, 0
      %p119 = por %p117, %p118
      %s121 = sadd.s32 %s120, 1
      %p124 = scmp.eq.s32.totalorder %s23, 7
      %p125 = scmp.ne.s32.totalorder %s120, %s122
      %p126 = scmp.eq.s32.totalorder %s23, 0
      %p127 = por %p125, %p126
      %p128 = scmp.ne.s32.totalorder %s120, %s122
      %p129 = scmp.eq.s32.totalorder %s28, 7
      %p130 = por %p128, %p129
      %p131 = scmp.ne.s32.totalorder %s122, %s123
      %p132 = scmp.eq.s32.totalorder %s28, 0
      %p133 = por %p131, %p132
      %p134 = scmp.ne.s32.totalorder %s122, %s123
      %p135 = scmp.eq.s32.totalorder %s29, 7
      %p136 = por %p134, %p135
      %p138 = scmp.ne.s32.totalorder %s123, %s137
      %p139 = scmp.eq.s32.totalorder %s29, 0
      %p140 = por %p138, %p139
      %s142 = sadd.s32 %s141, 1
      %p145 = scmp.eq.s32.totalorder %s23, 7
      %p146 = scmp.ne.s32.totalorder %s141, %s143
      %p147 = scmp.eq.s32.totalorder %s23, 0
      %p148 = por %p146, %p147
      %p149 = scmp.ne.s32.totalorder %s141, %s143
      %p150 = scmp.eq.s32.totalorder %s28, 7
      %p151 = por %p149, %p150
      %p152 = scmp.ne.s32.totalorder %s143, %s144
      %p153 = scmp.eq.s32.totalorder %s28, 0
      %p154 = por %p152, %p153
      %p155 = scmp.ne.s32.totalorder %s143, %s144
      %p156 = scmp.eq.s32.totalorder %s29, 7
      %p157 = por %p155, %p156
      %p159 = scmp.ne.s32.totalorder %s144, %s158
      %p160 = scmp.eq.s32.totalorder %s29, 0
      %p161 = por %p159, %p160
      %s162 = ssub.s32 %s23, %s30
      %p163 = scmp.eq.s32.totalorder %s162, 0
      %s165 = sadd.s32 %s164, 1
      %s166 = scalar_select %p163, %s164, %s165
      %p169 = pneg %p163
      %p170 = scmp.eq.s32.totalorder %s23, 7
      %p171 = por %p169, %p170
      %p172 = scmp.ne.s32.totalorder %s164, %s167
      %p173 = scmp.eq.s32.totalorder %s23, 0
      %p174 = por %p172, %p173
      %p175 = scmp.ne.s32.totalorder %s164, %s167
      %p176 = scmp.eq.s32.totalorder %s28, 7
      %p177 = por %p175, %p176
      %p178 = scmp.ne.s32.totalorder %s167, %s168
      %p179 = scmp.eq.s32.totalorder %s28, 0
      %p180 = por %p178, %p179
      %p181 = scmp.ne.s32.totalorder %s167, %s168
      %p182 = scmp.eq.s32.totalorder %s29, 7
      %p183 = por %p181, %p182
      %p185 = scmp.ne.s32.totalorder %s168, %s184
      %p186 = scmp.eq.s32.totalorder %s29, 0
      %p187 = por %p185, %p186
      %s189 = sadd.s32 %s188, 1
      %p192 = scmp.eq.s32.totalorder %s23, 7
      %p193 = scmp.ne.s32.totalorder %s188, %s190
      %p194 = scmp.eq.s32.totalorder %s23, 0
      %p195 = por %p193, %p194
      %p196 = scmp.ne.s32.totalorder %s188, %s190
      %p197 = scmp.eq.s32.totalorder %s28, 7
      %p198 = por %p196, %p197
      %p199 = scmp.ne.s32.totalorder %s190, %s191
      %p200 = scmp.eq.s32.totalorder %s28, 0
      %p201 = por %p199, %p200
      %p202 = scmp.ne.s32.totalorder %s190, %s191
      %p203 = scmp.eq.s32.totalorder %s29, 7
      %p204 = por %p202, %p203
      %p206 = scmp.ne.s32.totalorder %s191, %s205
      %p207 = scmp.eq.s32.totalorder %s29, 0
      %p208 = por %p206, %p207
      %p209 = scmp.le.s32.totalorder 1, %s23
      %p210 = scmp.lt.s32.totalorder %s23, 9
      %p211 = pnand %p209, %p210
      %p212 = pneg %p211
      // Predicated region
      $region9: #{tpu_custom_call.1} parent=5 // pred_check
        _
      $region10: #{tpu_custom_call.1} parent=5 // pred_check_branch
        %214 = sbr.rel (%p211) target = $region12
      $region11: #{tpu_custom_call.1} parent=5 // pred_region
        %s215 = ssub.s32 %s23, 1
        // Predicated region
        $region13: #{tpu_custom_call.1} parent=11 // pred_check
          %p216 = pneg %p70
        $region14: #{tpu_custom_call.1} parent=11 // pred_check_branch
          %218 = sbr.rel (%p216) target = $region16
        $region15: #{tpu_custom_call.1} parent=11 // pred_region
          %s220 = ssub.s32 128, 128
          %221 = vsyncadd [#allocation7], %s220
          %s223 = sshll.u32 [#allocation6], 4
          %s224 = int_to_ptr.vmem [resolvable:$true] %s223
          %226 = dma.hbm_to_vmem [thread:$0]  %s1, 128, %s224, [#allocation7]
        $region16: #{tpu_custom_call.1} parent=11 // pred_fallthru
          _
        // Predicated region
        $region17: #{tpu_custom_call.1} parent=11 // pred_check
          %p227 = pneg %p91
        $region18: #{tpu_custom_call.1} parent=11 // pred_check_branch
          %229 = sbr.rel (%p227) target = $region20
        $region19: #{tpu_custom_call.1} parent=11 // pred_region
          %s231 = ssub.s32 4096, 4096
          %232 = vsyncadd [#allocation7], %s231
          %s233 = sshll.u32 [#allocation8], 4
          %s234 = int_to_ptr.vmem [resolvable:$true] %s233
          %239 = dma.hbm_to_vmem [thread:$0]  %s2, 4096, %s234, [#allocation7], 128, 128, 8
        $region20: #{tpu_custom_call.1} parent=11 // pred_fallthru
          _
        // Predicated region
        $region21: #{tpu_custom_call.1} parent=11 // pred_check
          %p240 = pneg %p112
        $region22: #{tpu_custom_call.1} parent=11 // pred_check_branch
          %242 = sbr.rel (%p240) target = $region24
        $region23: #{tpu_custom_call.1} parent=11 // pred_region
          _
        $region24: #{tpu_custom_call.1} parent=11 // pred_fallthru
          _
        // Predicated region
        $region25: #{tpu_custom_call.1} parent=11 // pred_check
          %p243 = pneg %p133
        $region26: #{tpu_custom_call.1} parent=11 // pred_check_branch
          %245 = sbr.rel (%p243) target = $region28
        $region27: #{tpu_custom_call.1} parent=11 // pred_region
          %s247 = ssub.s32 2048, 2048
          %248 = vsyncadd [#allocation10], %s247
          %s249 = sshll.u32 [#allocation9], 4
          %s250 = int_to_ptr.vmem [resolvable:$true] %s249
          %255 = dma.hbm_to_vmem [thread:$0]  %s4, 2048, %s250, [#allocation10], 128, 128, 8
        $region28: #{tpu_custom_call.1} parent=11 // pred_fallthru
          _
        // Predicated region
        $region29: #{tpu_custom_call.1} parent=11 // pred_check
          %p256 = pneg %p154
        $region30: #{tpu_custom_call.1} parent=11 // pred_check_branch
          %258 = sbr.rel (%p256) target = $region32
        $region31: #{tpu_custom_call.1} parent=11 // pred_region
          _
        $region32: #{tpu_custom_call.1} parent=11 // pred_fallthru
          _
      $region12: #{tpu_custom_call.1} parent=5 // pred_fallthru
        _
      %p259 = scmp.lt.s32.totalorder %s23, 8
      // Predicated region
      $region33: #{tpu_custom_call.1} parent=5 // pred_check
        %p260 = pneg %p259
      $region34: #{tpu_custom_call.1} parent=5 // pred_check_branch
        %262 = sbr.rel (%p260) target = $region36
      $region35: #{tpu_custom_call.1} parent=5 // pred_region
        // Predicated region
        $region37: #{tpu_custom_call.1} parent=35 // pred_check
          %p263 = pneg %p43
        $region38: #{tpu_custom_call.1} parent=35 // pred_check_branch
          %265 = sbr.rel (%p263) target = $region40
        $region39: #{tpu_custom_call.1} parent=35 // pred_region
          %s266 = sand.u32 %s33, 1
          %s267 = scalar_lea.sflag [#allocation4], %s266
          %s268 = sand.u32 %s33, 1
          %s269 = smul.addr %s268, 8
          %s270 = scalar_lea.vmem [#allocation3], %s269
          %s272 = ssub.s32 128, 128
          %273 = vsyncadd %s267, %s272
          %s274 = smul.addr %s23, 128
          %s275 = scalar_lea.hbm %s0, %s274
          %s277 = sshll.u32 %s270, 4
          %s278 = int_to_ptr.vmem [resolvable:$true] %s277
          %280 = dma.hbm_to_vmem [thread:$0]  %s275, 128, %s278, %s267
        $region40: #{tpu_custom_call.1} parent=35 // pred_fallthru
          _
      $region36: #{tpu_custom_call.1} parent=5 // pred_fallthru
        _
      %p281 = scmp.le.s32.totalorder 1, %s23
      %p282 = scmp.lt.s32.totalorder %s23, 9
      %p283 = pnand %p281, %p282
      %p284 = pneg %p283
      // Predicated region
      $region41: #{tpu_custom_call.1} parent=5 // pred_check
        _
      $region42: #{tpu_custom_call.1} parent=5 // pred_check_branch
        %286 = sbr.rel (%p283) target = $region44
      $region43: #{tpu_custom_call.1} parent=5 // pred_region
        %s287 = ssub.s32 %s23, 1
        %s288 = sand.u32 %s36, 1
        %s289 = scalar_lea.sflag [#allocation4], %s288
        %s290 = sand.u32 %s36, 1
        %s291 = smul.addr %s290, 8
        %s292 = scalar_lea.vmem [#allocation3], %s291
        // Predicated region
        $region45: #{tpu_custom_call.1} parent=43 // pred_check
          %p293 = pneg %p49
        $region46: #{tpu_custom_call.1} parent=43 // pred_check_branch
          %295 = sbr.rel (%p293) target = $region48
        $region47: #{tpu_custom_call.1} parent=43 // pred_region
          %296 = dma.done %s289, 128
        $region48: #{tpu_custom_call.1} parent=43 // pred_fallthru
          _
        // Predicated region
        $region49: #{tpu_custom_call.1} parent=43 // pred_check
          %p297 = pneg %p70
        $region50: #{tpu_custom_call.1} parent=43 // pred_check_branch
          %299 = sbr.rel (%p297) target = $region52
        $region51: #{tpu_custom_call.1} parent=43 // pred_region
          %300 = dma.done [#allocation7], 128
        $region52: #{tpu_custom_call.1} parent=43 // pred_fallthru
          _
        // Predicated region
        $region53: #{tpu_custom_call.1} parent=43 // pred_check
          %p301 = pneg %p91
        $region54: #{tpu_custom_call.1} parent=43 // pred_check_branch
          %303 = sbr.rel (%p301) target = $region56
        $region55: #{tpu_custom_call.1} parent=43 // pred_region
          %304 = dma.done [#allocation7], 4096
        $region56: #{tpu_custom_call.1} parent=43 // pred_fallthru
          _
        // Predicated region
        $region57: #{tpu_custom_call.1} parent=43 // pred_check
          %p305 = pneg %p133
        $region58: #{tpu_custom_call.1} parent=43 // pred_check_branch
          %307 = sbr.rel (%p305) target = $region60
        $region59: #{tpu_custom_call.1} parent=43 // pred_region
          %308 = dma.done [#allocation10], 2048
        $region60: #{tpu_custom_call.1} parent=43 // pred_fallthru
          _
        %s309 = sand.u32 %s36, 1
        %s310 = scalar_lea.sflag [#allocation4], %s309
        %s311 = sand.u32 %s36, 1
        %s312 = smul.addr %s311, 8
        %s313 = scalar_lea.vmem [#allocation3], %s312
        %p314 = pneg %p49
        %p315 = pneg %p46
        %p316 = pneg %p70
        %p317 = pneg %p67
        %p318 = pneg %p91
        %p319 = pneg %p88
        %p320 = pneg %p112
        %p321 = pneg %p109
        %p322 = pneg %p133
        %p323 = pneg %p130
        %p324 = pneg %p154
        %p325 = pneg %p151
        %p326 = pneg %p180
        %p327 = pneg %p177
        %s328 = sand.u32 %s167, 1
        %s329 = scalar_lea.sflag [#allocation5], %s328
        %s330 = sand.u32 %s167, 1
        %s331 = smul.addr %s330, 8
        %s332 = scalar_lea.vmem [#allocation11], %s331
        %p333 = pneg %p201
        %p334 = pneg %p198
        %p335 = scmp.eq.s32.totalorder %s28, 0
        // Predicated region
        $region61: #{tpu_custom_call.1} parent=43 // pred_check
          %p336 = pneg %p335
        $region62: #{tpu_custom_call.1} parent=43 // pred_check_branch
          %338 = sbr.rel (%p336) target = $region64
        $region63: #{tpu_custom_call.1} parent=43 // pred_region
          %v339 = vld [vmem:[#allocation6] sm:$0xff]
          %340 = vst [vmem:[#allocation2 + $0x8] sm:$0xff] %v339
        $region64: #{tpu_custom_call.1} parent=43 // pred_fallthru
          _
        %v341 = vld [vmem:[%s292] sm:$0xff]
        %342 = vst [vmem:[#allocation2] sm:$0xff] %v341
        %v343 = vld [vmem:[#allocation2] sm:$0xff]
        %v344 = vld [vmem:[#allocation2 + $0x8] sm:$0xff]
        %v345 = vld [vmem:[#allocation8] sm:$0xff]
        %v346 = vld [vmem:[#allocation8 + $0x8] sm:$0xff]
        %v347 = vld [vmem:[#allocation8 + $0x10] sm:$0xff]
        %v348 = vld [vmem:[#allocation8 + $0x18] sm:$0xff]
        %v349 = vld [vmem:[#allocation8 + $0x20] sm:$0xff]
        %v350 = vld [vmem:[#allocation8 + $0x28] sm:$0xff]
        %v351 = vld [vmem:[#allocation8 + $0x30] sm:$0xff]
        %v352 = vld [vmem:[#allocation8 + $0x38] sm:$0xff]
        %v353 = vld [vmem:[#allocation8 + $0x40] sm:$0xff]
        %v354 = vld [vmem:[#allocation8 + $0x48] sm:$0xff]
        %v355 = vld [vmem:[#allocation8 + $0x50] sm:$0xff]
        %v356 = vld [vmem:[#allocation8 + $0x58] sm:$0xff]
        %v357 = vld [vmem:[#allocation8 + $0x60] sm:$0xff]
        %v358 = vld [vmem:[#allocation8 + $0x68] sm:$0xff]
        %v359 = vld [vmem:[#allocation8 + $0x70] sm:$0xff]
        %v360 = vld [vmem:[#allocation8 + $0x78] sm:$0xff]
        %v361 = vld [vmem:[#allocation8 + $0x80] sm:$0xff]
        %v362 = vld [vmem:[#allocation8 + $0x88] sm:$0xff]
        %v363 = vld [vmem:[#allocation8 + $0x90] sm:$0xff]
        %v364 = vld [vmem:[#allocation8 + $0x98] sm:$0xff]
        %v365 = vld [vmem:[#allocation8 + $0xa0] sm:$0xff]
        %v366 = vld [vmem:[#allocation8 + $0xa8] sm:$0xff]
        %v367 = vld [vmem:[#allocation8 + $0xb0] sm:$0xff]
        %v368 = vld [vmem:[#allocation8 + $0xb8] sm:$0xff]
        %v369 = vld [vmem:[#allocation8 + $0xc0] sm:$0xff]
        %v370 = vld [vmem:[#allocation8 + $0xc8] sm:$0xff]
        %v371 = vld [vmem:[#allocation8 + $0xd0] sm:$0xff]
        %v372 = vld [vmem:[#allocation8 + $0xd8] sm:$0xff]
        %v373 = vld [vmem:[#allocation8 + $0xe0] sm:$0xff]
        %v374 = vld [vmem:[#allocation8 + $0xe8] sm:$0xff]
        %v375 = vld [vmem:[#allocation8 + $0xf0] sm:$0xff]
        %v376 = vld [vmem:[#allocation8 + $0xf8] sm:$0xff]
        %v377 = vld [vmem:[%s3] sm:$0x1]
        %v379 = vlaneseq
        %v380 = vshrl.u32 %v379, 7
        %v381 = vsub.s32 0, %v380
        %v382 = vrot.slane %v377, %v381
        %384 = vmatprep.subr.mxu0 0.0
        %385 = vmatpush1.msra.mxu0 %v345
        %386 = vmatprep.subr.mxu0 0.0
        %387 = vmatpush1.msra.mxu0 %v346
        %388 = vmatprep.subr.mxu0 0.0
        %389 = vmatpush1.msra.mxu0 %v347
        %390 = vmatprep.subr.mxu0 0.0
        %391 = vmatpush1.msra.mxu0 %v348
        %392 = vmatprep.subr.mxu0 0.0
        %393 = vmatpush1.msra.mxu0 %v349
        %394 = vmatprep.subr.mxu0 0.0
        %395 = vmatpush1.msra.mxu0 %v350
        %396 = vmatprep.subr.mxu0 0.0
        %397 = vmatpush1.msra.mxu0 %v351
        %398 = vmatprep.subr.mxu0 0.0
        %399 = vmatpush1.msra.mxu0 %v352
        %400 = vmatprep.subr.mxu0 0.0
        %401 = vmatpush1.msra.mxu0 %v353
        %402 = vmatprep.subr.mxu0 0.0
        %403 = vmatpush1.msra.mxu0 %v354
        %404 = vmatprep.subr.mxu0 0.0
        %405 = vmatpush1.msra.mxu0 %v355
        %406 = vmatprep.subr.mxu0 0.0
        %407 = vmatpush1.msra.mxu0 %v356
        %408 = vmatprep.subr.mxu0 0.0
        %409 = vmatpush1.msra.mxu0 %v357
        %410 = vmatprep.subr.mxu0 0.0
        %411 = vmatpush1.msra.mxu0 %v358
        %412 = vmatprep.subr.mxu0 0.0
        %413 = vmatpush1.msra.mxu0 %v359
        %414 = vmatprep.subr.mxu0 0.0
        %415 = vmatpush1.msra.mxu0 %v360
        %416 = vmatprep.subr.mxu0 0.0
        %417 = vmatpush1.msra.mxu0 %v361
        %418 = vmatprep.subr.mxu0 0.0
        %419 = vmatpush1.msra.mxu0 %v362
        %420 = vmatprep.subr.mxu0 0.0
        %421 = vmatpush1.msra.mxu0 %v363
        %422 = vmatprep.subr.mxu0 0.0
        %423 = vmatpush1.msra.mxu0 %v364
        %424 = vmatprep.subr.mxu0 0.0
        %425 = vmatpush1.msra.mxu0 %v365
        %426 = vmatprep.subr.mxu0 0.0
        %427 = vmatpush1.msra.mxu0 %v366
        %428 = vmatprep.subr.mxu0 0.0
        %429 = vmatpush1.msra.mxu0 %v367
        %430 = vmatprep.subr.mxu0 0.0
        %431 = vmatpush1.msra.mxu0 %v368
        %432 = vmatprep.subr.mxu0 0.0
        %433 = vmatpush1.msra.mxu0 %v369
        %434 = vmatprep.subr.mxu0 0.0
        %435 = vmatpush1.msra.mxu0 %v370
        %436 = vmatprep.subr.mxu0 0.0
        %437 = vmatpush1.msra.mxu0 %v371
        %438 = vmatprep.subr.mxu0 0.0
        %439 = vmatpush1.msra.mxu0 %v372
        %440 = vmatprep.subr.mxu0 0.0
        %441 = vmatpush1.msra.mxu0 %v373
        %442 = vmatprep.subr.mxu0 0.0
        %443 = vmatpush1.msra.mxu0 %v374
        %444 = vmatprep.subr.mxu0 0.0
        %445 = vmatpush1.msra.mxu0 %v375
        %446 = vmatprep.subr.mxu0 0.0
        %447 = vmatpush1.msra.mxu0 %v376
        %448 = vmatprep.mubr.f32.mxu0 %v344
        %449 = vmatmul.mubr.f32.gmra.mrb[0].mxu0 %v343
        %v450 = vpop.f32.mrb[0].mxu0
        %v451 = vadd.f32 %v382, %v450
        %v452 = vpop.f32.mrb[0].mxu0
        %453 = vdwg.mxu0
        %v454 = vtanh.pop %v451
        %455 = vst [vmem:[#allocation2 + $0x8] sm:$0xff] %v454
        %456 = vst [vmem:[#allocation12] sm:$0xff] %v454
        %v457 = vld [vmem:[#allocation9] sm:$0xff]
        %v458 = vld [vmem:[#allocation9 + $0x8] sm:$0xff]
        %v459 = vld [vmem:[#allocation9 + $0x10] sm:$0xff]
        %v460 = vld [vmem:[#allocation9 + $0x18] sm:$0xff]
        %v461 = vld [vmem:[#allocation9 + $0x20] sm:$0xff]
        %v462 = vld [vmem:[#allocation9 + $0x28] sm:$0xff]
        %v463 = vld [vmem:[#allocation9 + $0x30] sm:$0xff]
        %v464 = vld [vmem:[#allocation9 + $0x38] sm:$0xff]
        %v465 = vld [vmem:[#allocation9 + $0x40] sm:$0xff]
        %v466 = vld [vmem:[#allocation9 + $0x48] sm:$0xff]
        %v467 = vld [vmem:[#allocation9 + $0x50] sm:$0xff]
        %v468 = vld [vmem:[#allocation9 + $0x58] sm:$0xff]
        %v469 = vld [vmem:[#allocation9 + $0x60] sm:$0xff]
        %v470 = vld [vmem:[#allocation9 + $0x68] sm:$0xff]
        %v471 = vld [vmem:[#allocation9 + $0x70] sm:$0xff]
        %v472 = vld [vmem:[#allocation9 + $0x78] sm:$0xff]
        %v473 = vld [vmem:[%s5] sm:$0x1]
        %v475 = vlaneseq
        %v476 = vshrl.u32 %v475, 7
        %v477 = vsub.s32 0, %v476
        %v478 = vrot.slane %v473, %v477
        %480 = vmatprep.subr.mxu0 0.0
        %481 = vmatpush1.msra.mxu0 %v457
        %482 = vmatprep.subr.mxu0 0.0
        %483 = vmatpush1.msra.mxu0 %v458
        %484 = vmatprep.subr.mxu0 0.0
        %485 = vmatpush1.msra.mxu0 %v459
        %486 = vmatprep.subr.mxu0 0.0
        %487 = vmatpush1.msra.mxu0 %v460
        %488 = vmatprep.subr.mxu0 0.0
        %489 = vmatpush1.msra.mxu0 %v461
        %490 = vmatprep.subr.mxu0 0.0
        %491 = vmatpush1.msra.mxu0 %v462
        %492 = vmatprep.subr.mxu0 0.0
        %493 = vmatpush1.msra.mxu0 %v463
        %494 = vmatprep.subr.mxu0 0.0
        %495 = vmatpush1.msra.mxu0 %v464
        %496 = vmatprep.subr.mxu0 0.0
        %497 = vmatpush1.msra.mxu0 %v465
        %498 = vmatprep.subr.mxu0 0.0
        %499 = vmatpush1.msra.mxu0 %v466
        %500 = vmatprep.subr.mxu0 0.0
        %501 = vmatpush1.msra.mxu0 %v467
        %502 = vmatprep.subr.mxu0 0.0
        %503 = vmatpush1.msra.mxu0 %v468
        %504 = vmatprep.subr.mxu0 0.0
        %505 = vmatpush1.msra.mxu0 %v469
        %506 = vmatprep.subr.mxu0 0.0
        %507 = vmatpush1.msra.mxu0 %v470
        %508 = vmatprep.subr.mxu0 0.0
        %509 = vmatpush1.msra.mxu0 %v471
        %510 = vmatprep.subr.mxu0 0.0
        %511 = vmatpush1.msra.mxu0 %v472
        %512 = vmatprep.subr.mxu0 0.0
        %513 = vmatpush1.msra.mxu0 0.0
        %514 = vmatprep.subr.mxu0 0.0
        %515 = vmatpush1.msra.mxu0 0.0
        %516 = vmatprep.subr.mxu0 0.0
        %517 = vmatpush1.msra.mxu0 0.0
        %518 = vmatprep.subr.mxu0 0.0
        %519 = vmatpush1.msra.mxu0 0.0
        %520 = vmatprep.subr.mxu0 0.0
        %521 = vmatpush1.msra.mxu0 0.0
        %522 = vmatprep.subr.mxu0 0.0
        %523 = vmatpush1.msra.mxu0 0.0
        %524 = vmatprep.subr.mxu0 0.0
        %525 = vmatpush1.msra.mxu0 0.0
        %526 = vmatprep.subr.mxu0 0.0
        %527 = vmatpush1.msra.mxu0 0.0
        %528 = vmatprep.subr.mxu0 0.0
        %529 = vmatpush1.msra.mxu0 0.0
        %530 = vmatprep.subr.mxu0 0.0
        %531 = vmatpush1.msra.mxu0 0.0
        %532 = vmatprep.subr.mxu0 0.0
        %533 = vmatpush1.msra.mxu0 0.0
        %534 = vmatprep.subr.mxu0 0.0
        %535 = vmatpush1.msra.mxu0 0.0
        %536 = vmatprep.subr.mxu0 0.0
        %537 = vmatpush1.msra.mxu0 0.0
        %538 = vmatprep.subr.mxu0 0.0
        %539 = vmatpush1.msra.mxu0 0.0
        %540 = vmatprep.subr.mxu0 0.0
        %541 = vmatpush1.msra.mxu0 0.0
        %542 = vmatprep.subr.mxu0 0.0
        %543 = vmatpush1.msra.mxu0 0.0
        %544 = vmatprep.mubr.f32.mxu0 0.0
        %545 = vmatmul.mubr.f32.gmra.mrb[0].mxu0 %v454
        %v546 = vpop.f32.mrb[0].mxu0
        %v547 = vadd.f32 %v478, %v546
        %v548 = vpop.f32.mrb[0].mxu0
        %549 = vdwg.mxu0
        %550 = vmax.xlane.f32.xlu0 %v547
        %v551 = vpop.xlane.xlu0 %550
        %v552 = vsub.f32 %v547, %v551
        %v553 = vmul.f32 %v552, 1.442695
        %v554 = vpow.pop %v553
        %555 = vadd.xlane.f32.xlu0 %v554
        %v556 = vpop.xlane.xlu0 %555
        %v557 = vlog2.pop %v556
        %v558 = vmul.f32 %v557, 0.6931472
        %v559 = vsub.f32 %v552, %v558
        %560 = vst [vmem:[%s332] sm:$0xff] %v559
        %s561 = sand.u32 %s167, 1
        %s562 = scalar_lea.sflag [#allocation5], %s561
        %s563 = sand.u32 %s167, 1
        %s564 = smul.addr %s563, 8
        %s565 = scalar_lea.vmem [#allocation11], %s564
        // Predicated region
        $region65: #{tpu_custom_call.1} parent=43 // pred_check
          %p566 = pneg %p177
        $region66: #{tpu_custom_call.1} parent=43 // pred_check_branch
          %568 = sbr.rel (%p566) target = $region68
        $region67: #{tpu_custom_call.1} parent=43 // pred_region
          %s570 = ssub.s32 128, 128
          %571 = vsyncadd %s562, %s570
          %s572 = smul.addr %s28, 128
          %s573 = scalar_lea.hbm %s6, %s572
          %s575 = sshll.u32 %s565, 4
          %s576 = int_to_ptr.vmem [resolvable:$true] %s575
          %578 = dma.vmem_to_hbm [thread:$0]  %s576, 128, %s573, %s562
        $region68: #{tpu_custom_call.1} parent=43 // pred_fallthru
          _
        // Predicated region
        $region69: #{tpu_custom_call.1} parent=43 // pred_check
          %p579 = pneg %p198
        $region70: #{tpu_custom_call.1} parent=43 // pred_check_branch
          %581 = sbr.rel (%p579) target = $region72
        $region71: #{tpu_custom_call.1} parent=43 // pred_region
          %s583 = ssub.s32 128, 128
          %584 = vsyncadd [#allocation13], %s583
          %s586 = sshll.u32 [#allocation12], 4
          %s587 = int_to_ptr.vmem [resolvable:$true] %s586
          %589 = dma.vmem_to_hbm [thread:$0]  %s587, 128, %s7, [#allocation13]
        $region72: #{tpu_custom_call.1} parent=43 // pred_fallthru
          _
        // Predicated region
        $region73: #{tpu_custom_call.1} parent=43 // pred_check
          %p590 = pneg %p198
        $region74: #{tpu_custom_call.1} parent=43 // pred_check_branch
          %592 = sbr.rel (%p590) target = $region76
        $region75: #{tpu_custom_call.1} parent=43 // pred_region
          %593 = dma.done [#allocation13], 128
        $region76: #{tpu_custom_call.1} parent=43 // pred_fallthru
          _
      $region44: #{tpu_custom_call.1} parent=5 // pred_fallthru
        _
      %p594 = scmp.le.s32.totalorder 2, %s23
      // Predicated region
      $region77: #{tpu_custom_call.1} parent=5 // pred_check
        %p595 = pneg %p594
      $region78: #{tpu_custom_call.1} parent=5 // pred_check_branch
        %597 = sbr.rel (%p595) target = $region80
      $region79: #{tpu_custom_call.1} parent=5 // pred_region
        %s598 = ssub.s32 %s23, 2
        // Predicated region
        $region81: #{tpu_custom_call.1} parent=79 // pred_check
          %p599 = pneg %p183
        $region82: #{tpu_custom_call.1} parent=79 // pred_check_branch
          %601 = sbr.rel (%p599) target = $region84
        $region83: #{tpu_custom_call.1} parent=79 // pred_region
          %s602 = sand.u32 %s168, 1
          %s603 = scalar_lea.sflag [#allocation5], %s602
          %s604 = sand.u32 %s168, 1
          %s605 = smul.addr %s604, 8
          %s606 = scalar_lea.vmem [#allocation11], %s605
          %607 = dma.done %s603, 128
        $region84: #{tpu_custom_call.1} parent=79 // pred_fallthru
          _
      $region80: #{tpu_custom_call.1} parent=5 // pred_fallthru
        _
    $region6: #{tpu_custom_call.1} parent=1 // loop_footer
      %s27 = sadd.s32 1, %s23
    $region7: #{tpu_custom_call.1} parent=1 // loop_footer_branch
      %22 = sbr.rel target = $region3
    $region8: #{tpu_custom_call.1} parent=1 // loop_exit
      _
    %608 = vsyncpa [#allocation4], 1
    %s609 = scalar_lea.sflag [#allocation4], 1
    %610 = vsyncpa %s609, 1
    %611 = vsyncpa [#allocation7], 1
    %612 = vsyncpa [#allocation10], 1
    %613 = vsyncpa [#allocation5], 1
    %s614 = scalar_lea.sflag [#allocation5], 1
    %615 = vsyncpa %s614, 1
    %616 = vsyncpa [#allocation13], 1

</llo_original>
